<compile_context>
chip_gen: v7x
topology: tpu7x:2x2x1
jax: 0.10.0
libtpu: 0.0.40
codegen_flags: <defaults>
</compile_context>

<pallas_src>
import functools

import jax
import jax.numpy as jnp
from jax.experimental import pallas as pl
from jax.experimental.pallas import tpu as pltpu


def _uar_loss_kernel(inputs_ref, targets_ref, out_ref, tp_acc, cnt_acc,
                     *, eps, num_classes):
    step = pl.program_id(0)

    @pl.when(step == 0)
    def _():
        tp_acc[...] = jnp.zeros_like(tp_acc)
        cnt_acc[...] = jnp.zeros_like(cnt_acc)

    x = inputs_ref[...].astype(jnp.float32)      # (TILE_B, C) logits
    t = targets_ref[...].astype(jnp.float32)     # (TILE_B, C) one-hot targets

    # Numerically stable softmax *numerator*; avoid the full (TILE_B, C)
    # divide by folding the per-row reciprocal into the tp product.
    m = jnp.max(x, axis=1, keepdims=True)        # (TILE_B, 1) lane reduce
    e = jnp.exp(x - m)                           # EUP
    denom = jnp.sum(e, axis=1, keepdims=True)    # (TILE_B, 1)
    inv = 1.0 / denom                            # exact, per-row only
    w = t * (e * inv)                            # soft true positives / element

    # Batch (sublane) reduction on the MXU instead of the XLU:
    # (1, TILE_B) @ (TILE_B, C) -> (1, C)
    ones_row = jnp.ones((1, w.shape[0]), jnp.float32)
    tp_acc[...] += jnp.dot(ones_row, w, preferred_element_type=jnp.float32)
    cnt_acc[...] += jnp.dot(ones_row, t, preferred_element_type=jnp.float32)

    @pl.when(step == pl.num_programs(0) - 1)
    def _():
        # recall_c = tp_c / (tp_c + fn_c + eps) == tp_c / (count_c + eps)
        recall = tp_acc[...] / (cnt_acc[...] + eps)       # (1, C)
        uar = jnp.sum(recall) / jnp.float32(num_classes)
        out_ref[0, 0] = 1.0 - uar


def _round_up(x, m):
    return ((x + m - 1) // m) * m


def _choose_tile_b(batch, num_classes, in_itemsize, tgt_itemsize):
    """Pick a batch tile that is a sublane multiple and fits comfortably in
    the scoped VMEM budget of every TPU generation (incl. v7x's 64 MiB)."""
    c_pad = max(128, _round_up(num_classes, 128))          # lane-dim padding
    # 2 inputs x 2 pipeline buffers per batch row:
    bytes_per_row = 2 * c_pad * (in_itemsize + tgt_itemsize)
    budget = 8 * 1024 * 1024                               # conservative
    tile = max(8, budget // max(bytes_per_row, 1))
    tile = min(tile, 1024, _round_up(batch, 8))
    return max(8, (tile // 8) * 8)


def uar_loss(inputs, targets, eps=1e-12, tile_b=None):
    """Pallas TPU implementation of UARLoss.forward.

    inputs:  (B, C) float logits (f32 or bf16; cast to f32 in-kernel)
    targets: (B, C) one-hot (any numeric dtype; cast to f32 in-kernel)
    returns: scalar float32 loss = 1 - UAR
    """
    assert inputs.ndim == 2 and targets.shape == inputs.shape
    batch, num_classes = inputs.shape

    if tile_b is None:
        tile_b = _choose_tile_b(batch, num_classes,
                                jnp.dtype(inputs.dtype).itemsize,
                                jnp.dtype(targets.dtype).itemsize)
    tile_b = max(8, (tile_b // 8) * 8)

    b_pad = pl.cdiv(batch, tile_b) * tile_b
    if b_pad != batch:
        pad = b_pad - batch
        # Zero-padded rows have all-zero targets -> zero tp and zero count,
        # so they do not perturb the per-class recalls.
        inputs = jnp.pad(inputs, ((0, pad), (0, 0)))
        targets = jnp.pad(targets, ((0, pad), (0, 0)))

    grid = (b_pad // tile_b,)
    kernel = functools.partial(_uar_loss_kernel, eps=float(eps),
                               num_classes=num_classes)

    out = pl.pallas_call(
        kernel,
        out_shape=jax.ShapeDtypeStruct((1, 1), jnp.float32),
        grid_spec=pltpu.PrefetchScalarGridSpec(
            num_scalar_prefetch=0,
            grid=grid,
            in_specs=[
                pl.BlockSpec((tile_b, num_classes), lambda i: (i, 0)),
                pl.BlockSpec((tile_b, num_classes), lambda i: (i, 0)),
            ],
            out_specs=pl.BlockSpec((1, 1), lambda i: (0, 0),
                                   memory_space=pltpu.SMEM),
            scratch_shapes=[
                pltpu.VMEM((1, num_classes), jnp.float32),   # tp accumulator
                pltpu.VMEM((1, num_classes), jnp.float32),   # count accumulator
            ],
        ),
        compiler_params=pltpu.CompilerParams(
            dimension_semantics=("arbitrary",)),
    )(inputs, targets)
    return out[0, 0]


def _uar_loss_ref(inputs, targets, eps=1e-12):
    p = jax.nn.softmax(inputs.astype(jnp.float32), axis=1)
    t = targets.astype(jnp.float32)
    tp = jnp.sum(t * p, axis=0)
    fn = jnp.sum(t * (1.0 - p), axis=0)
    recall = tp / (tp + fn + eps)
    return 1.0 - jnp.mean(recall)


if __name__ == "__main__":
    key = jax.random.PRNGKey(0)

    # Case 1: baseline small shape, single grid step.
    k1, k2, key = jax.random.split(key, 3)
    batch, num_classes = 8, 4
    inputs = jax.random.normal(k1, (batch, num_classes), dtype=jnp.float32)
    labels = jax.random.randint(k2, (batch,), 0, num_classes)
    targets = jax.nn.one_hot(labels, num_classes, dtype=jnp.float32)
    loss = jax.block_until_ready(uar_loss(inputs, targets))
    ref = _uar_loss_ref(inputs, targets)
    assert jnp.allclose(loss, ref, atol=1e-5, rtol=1e-5), (loss, ref)

    # Case 2: multi-step grid + batch padding (B=20, tile=8 -> 3 steps).
    k1, k2, key = jax.random.split(key, 3)
    batch = 20
    inputs2 = jax.random.normal(k1, (batch, num_classes), dtype=jnp.float32)
    labels2 = jax.random.randint(k2, (batch,), 0, num_classes)
    targets2 = jax.nn.one_hot(labels2, num_classes, dtype=jnp.float32)
    loss2 = jax.block_until_ready(uar_loss(inputs2, targets2, tile_b=8))
    ref2 = _uar_loss_ref(inputs2, targets2)
    assert jnp.allclose(loss2, ref2, atol=1e-5, rtol=1e-5), (loss2, ref2)

    # Case 3: bf16 logits in HBM, f32 compute in-kernel.
    k1, k2, key = jax.random.split(key, 3)
    batch = 16
    inputs3 = jax.random.normal(k1, (batch, num_classes),
                                dtype=jnp.float32).astype(jnp.bfloat16)
    labels3 = jax.random.randint(k2, (batch,), 0, num_classes)
    targets3 = jax.nn.one_hot(labels3, num_classes, dtype=jnp.float32)
    loss3 = jax.block_until_ready(uar_loss(inputs3, targets3, tile_b=8))
    ref3 = _uar_loss_ref(inputs3, targets3)
    assert jnp.allclose(loss3, ref3, atol=1e-4, rtol=1e-4), (loss3, ref3)

    print("KERNEL_OK")
</pallas_src>

<mosaic_0001>
module attributes {stable_mosaic.version = 11 : i64} {
  func.func @_uar_loss_kernel(%arg0: i32, %arg1: memref<8x4xf32, #tpu.memory_space<vmem>>, %arg2: memref<8x4xf32, #tpu.memory_space<vmem>>, %arg3: memref<1x1xf32, #tpu.memory_space<smem>>, %arg4: memref<1x4xf32, #tpu.memory_space<vmem>>, %arg5: memref<1x4xf32, #tpu.memory_space<vmem>>) attributes {dimension_semantics = [#tpu.dimension_semantics<arbitrary>], iteration_bounds = array<i64: 1>, scalar_prefetch = 0 : i64, scratch_operands = 2 : i64, tpu.core_type = #tpu.core_type<tc>, window_params = [{transform_indices = @transform_0, window_bounds = array<i64: 8, 4>}, {transform_indices = @transform_1, window_bounds = array<i64: 8, 4>}, {transform_indices = @transform_2, window_bounds = array<i64: 1, 1>}]} {
    %c0_i32 = arith.constant 0 : i32
    %0 = arith.cmpi eq, %arg0, %c0_i32 : i32
    %1 = arith.extui %0 : i1 to i32
    %c0_i32_0 = arith.constant 0 : i32
    %2 = arith.cmpi ne, %1, %c0_i32_0 : i32
    scf.if %2 {
      %cst_19 = arith.constant 0.000000e+00 : f32
      %29 = vector.broadcast %cst_19 : f32 to vector<1x4xf32>
      %c0_20 = arith.constant 0 : index
      %c0_21 = arith.constant 0 : index
      %30 = vector.load %arg4[%c0_20, %c0_21] : memref<1x4xf32, #tpu.memory_space<vmem>>, vector<1x4xf32>
      tpu.vector_store %arg4[%c0_20, %c0_21], %29 {strides = array<i32>} : memref<1x4xf32, #tpu.memory_space<vmem>>, vector<1x4xf32>,
      %cst_22 = arith.constant 0.000000e+00 : f32
      %31 = vector.broadcast %cst_22 : f32 to vector<1x4xf32>
      %c0_23 = arith.constant 0 : index
      %c0_24 = arith.constant 0 : index
      %32 = vector.load %arg5[%c0_23, %c0_24] : memref<1x4xf32, #tpu.memory_space<vmem>>, vector<1x4xf32>
      tpu.vector_store %arg5[%c0_23, %c0_24], %31 {strides = array<i32>} : memref<1x4xf32, #tpu.memory_space<vmem>>, vector<1x4xf32>,
    } else {
    }
    %c0 = arith.constant 0 : index
    %c0_1 = arith.constant 0 : index
    %3 = vector.load %arg1[%c0, %c0_1] : memref<8x4xf32, #tpu.memory_space<vmem>>, vector<8x4xf32>
    %c0_2 = arith.constant 0 : index
    %c0_3 = arith.constant 0 : index
    %4 = vector.load %arg2[%c0_2, %c0_3] : memref<8x4xf32, #tpu.memory_space<vmem>>, vector<8x4xf32>
    %cst = arith.constant dense<0xFF800000> : vector<8xf32>
    %5 = vector.multi_reduction <maximumf>, %3, %cst [1] : vector<8x4xf32> to vector<8xf32>
    %6 = vector.shape_cast %5 : vector<8xf32> to vector<8x1xf32>
    %7 = vector.broadcast %6 : vector<8x1xf32> to vector<8x4xf32>
    %8 = arith.subf %3, %7 : vector<8x4xf32>
    %9 = math.exp %8 : vector<8x4xf32>
    %cst_4 = arith.constant dense<0.000000e+00> : vector<8xf32>
    %10 = vector.multi_reduction <add>, %9, %cst_4 [1] : vector<8x4xf32> to vector<8xf32>
    %11 = vector.shape_cast %10 : vector<8xf32> to vector<8x1xf32>
    %cst_5 = arith.constant 1.000000e+00 : f32
    %12 = vector.broadcast %cst_5 : f32 to vector<8x1xf32>
    %13 = arith.divf %12, %11 : vector<8x1xf32>
    %14 = vector.broadcast %13 : vector<8x1xf32> to vector<8x4xf32>
    %15 = arith.mulf %9, %14 : vector<8x4xf32>
    %16 = arith.mulf %4, %15 : vector<8x4xf32>
    %cst_6 = arith.constant 1.000000e+00 : f32
    %17 = vector.broadcast %cst_6 : f32 to vector<1x8xf32>
    %c0_7 = arith.constant 0 : index
    %c0_8 = arith.constant 0 : index
    %18 = vector.load %arg4[%c0_7, %c0_8] : memref<1x4xf32, #tpu.memory_space<vmem>>, vector<1x4xf32>
    %cst_9 = arith.constant dense<0.000000e+00> : vector<1x4xf32>
    %19 = tpu.matmul %17, %16, %cst_9 {dimension_numbers = #tpu.dot_dimension_numbers<[1], [0], [0], [1], [0, 0, 1, 1], [], []>} : vector<1x8xf32>, vector<8x4xf32>, vector<1x4xf32> -> vector<1x4xf32>
    %20 = arith.addf %18, %19 : vector<1x4xf32>
    %c0_10 = arith.constant 0 : index
    %c0_11 = arith.constant 0 : index
    %21 = vector.load %arg4[%c0_10, %c0_11] : memref<1x4xf32, #tpu.memory_space<vmem>>, vector<1x4xf32>
    tpu.vector_store %arg4[%c0_10, %c0_11], %20 {strides = array<i32>} : memref<1x4xf32, #tpu.memory_space<vmem>>, vector<1x4xf32>,
    %c0_12 = arith.constant 0 : index
    %c0_13 = arith.constant 0 : index
    %22 = vector.load %arg5[%c0_12, %c0_13] : memref<1x4xf32, #tpu.memory_space<vmem>>, vector<1x4xf32>
    %cst_14 = arith.constant dense<0.000000e+00> : vector<1x4xf32>
    %23 = tpu.matmul %17, %4, %cst_14 {dimension_numbers = #tpu.dot_dimension_numbers<[1], [0], [0], [1], [0, 0, 1, 1], [], []>} : vector<1x8xf32>, vector<8x4xf32>, vector<1x4xf32> -> vector<1x4xf32>
    %24 = arith.addf %22, %23 : vector<1x4xf32>
    %c0_15 = arith.constant 0 : index
    %c0_16 = arith.constant 0 : index
    %25 = vector.load %arg5[%c0_15, %c0_16] : memref<1x4xf32, #tpu.memory_space<vmem>>, vector<1x4xf32>
    tpu.vector_store %arg5[%c0_15, %c0_16], %24 {strides = array<i32>} : memref<1x4xf32, #tpu.memory_space<vmem>>, vector<1x4xf32>,
    %c0_i32_17 = arith.constant 0 : i32
    %26 = arith.cmpi eq, %arg0, %c0_i32_17 : i32
    %27 = arith.extui %26 : i1 to i32
    %c0_i32_18 = arith.constant 0 : i32
    %28 = arith.cmpi ne, %27, %c0_i32_18 : i32
    scf.if %28 {
      %c0_19 = arith.constant 0 : index
      %c0_20 = arith.constant 0 : index
      %29 = vector.load %arg4[%c0_19, %c0_20] : memref<1x4xf32, #tpu.memory_space<vmem>>, vector<1x4xf32>
      %c0_21 = arith.constant 0 : index
      %c0_22 = arith.constant 0 : index
      %30 = vector.load %arg5[%c0_21, %c0_22] : memref<1x4xf32, #tpu.memory_space<vmem>>, vector<1x4xf32>
      %cst_23 = arith.constant 9.99999996E-13 : f32
      %31 = vector.broadcast %cst_23 : f32 to vector<1x4xf32>
      %32 = arith.addf %30, %31 : vector<1x4xf32>
      %33 = arith.divf %29, %32 : vector<1x4xf32>
      %34 = vector.shape_cast %33 : vector<1x4xf32> to vector<1x1x4xf32>
      %cst_24 = arith.constant dense<0.000000e+00> : vector<1xf32>
      %35 = vector.multi_reduction <add>, %34, %cst_24 [1, 2] : vector<1x1x4xf32> to vector<1xf32>
      %36 = vector.shape_cast %35 : vector<1xf32> to vector<1x1x1xf32>
      %37 = vector.extract %36[0, 0, 0] : f32 from vector<1x1x1xf32>
      %cst_25 = arith.constant 4.000000e+00 : f32
      %38 = arith.divf %37, %cst_25 : f32
      %cst_26 = arith.constant 1.000000e+00 : f32
      %39 = arith.subf %cst_26, %38 : f32
      %c0_27 = arith.constant 0 : index
      %c0_28 = arith.constant 0 : index
      %40 = memref.load %arg3[%c0_27, %c0_28] : memref<1x1xf32, #tpu.memory_space<smem>>
      memref.store %39, %arg3[%c0_27, %c0_28] : memref<1x1xf32, #tpu.memory_space<smem>>
    } else {
    }
    return
  }
  func.func @transform_0(%arg0: i32) -> (i32, i32) {
    %c0_i32 = arith.constant 0 : i32
    %c0_i32_0 = arith.constant 0 : i32
    return %arg0, %c0_i32 : i32, i32
  }
  func.func @transform_1(%arg0: i32) -> (i32, i32) {
    %c0_i32 = arith.constant 0 : i32
    %c0_i32_0 = arith.constant 0 : i32
    return %arg0, %c0_i32 : i32, i32
  }
  func.func @transform_2(%arg0: i32) -> (i32, i32) {
    %c0_i32 = arith.constant 0 : i32
    %c0_i32_0 = arith.constant 0 : i32
    %c0_i32_1 = arith.constant 0 : i32
    return %c0_i32, %c0_i32_0 : i32, i32
  }
}

</mosaic_0001>

<llo_original>
// kernel: tpu_custom_call.1
$region0: #{tpu_custom_call.1}
  #allocation0 [shape = 'u32[]', space=smem, size = 0x4, offset = 0x4, fixed_abs, tag = 'smem constant byte address 0x4 - core index']
  #allocation1 [shape = 'u32[144,128]{1,0:T(1,128)}', space=vmem, size = 0x12000, scoped, tag = 'internal scratch']
  #allocation2 [shape = 'f32[1,4]{1,0:T(1,128)}', space=vmem, size = 0x200, scoped, tag = 'scratch operand']
  #allocation3 [shape = 'f32[1,4]{1,0:T(1,128)}', space=vmem, size = 0x200, scoped, tag = 'scratch operand']
  %s0 = inlined_call_operand.vmem [shape: f32[8,4], index: 0, kind: input, shape index: {}]
  %s1 = inlined_call_operand.vmem [shape: f32[8,4], index: 1, kind: input, shape index: {}]
  %s2 = inlined_call_operand.hbm [shape: f32[1,1], index: 2, kind: output, shape index: {}]
  %s3 = sld [smem:[#allocation0]]
  $region26: #{tpu_custom_call.1} parent=0
    _
  %s5 = ssub.s32 1, %s3
  %s6 = scalar_select 0, %s5, %s3
  $region1: #{tpu_custom_call.1} parent=0
    #allocation4 [shape = 'u8[512]{0}', space=smem, size = 0x200, scoped, tag = 'output window, operand 0, single buffered']
    #allocation5 [shape = 's32[1]{0}', space=sflag, size = 0x4, scoped, tag = 'scoped memory for tpu_custom_call.1']
    %7 = vsyncpa [#allocation5], 0
    // Predicated region
    $region2: #{tpu_custom_call.1} parent=1 // pred_check
      _
    $region3: #{tpu_custom_call.1} parent=1 // pred_check_branch
      %9 = sbr.rel (0) target = $region5
    $region4: #{tpu_custom_call.1} parent=1 // pred_region
      _
    $region5: #{tpu_custom_call.1} parent=1 // pred_fallthru
      _
    // Predicated region
    $region6: #{tpu_custom_call.1} parent=1 // pred_check
      _
    $region7: #{tpu_custom_call.1} parent=1 // pred_check_branch
      %11 = sbr.rel (0) target = $region9
    $region8: #{tpu_custom_call.1} parent=1 // pred_region
      _
    $region9: #{tpu_custom_call.1} parent=1 // pred_fallthru
      _
    %p12 = scmp.eq.s32.totalorder 0, 0
    // Predicated region
    $region10: #{tpu_custom_call.1} parent=1 // pred_check
      %p13 = pneg %p12
    $region11: #{tpu_custom_call.1} parent=1 // pred_check_branch
      %15 = sbr.rel (%p13) target = $region13
    $region12: #{tpu_custom_call.1} parent=1 // pred_region
      %vm16 = vcmask 24576
      %17 = vst.msk [vmem:[#allocation2] sm:$0x1] %vm16, 0.0
      %18 = vst.msk [vmem:[#allocation3] sm:$0x1] %vm16, 0.0
    $region13: #{tpu_custom_call.1} parent=1 // pred_fallthru
      _
    %v19 = vld [vmem:[%s0] sm:$0xff]
    %v20 = vld [vmem:[%s1] sm:$0xff]
    %vm21 = vcmask 31744
    %v22 = vsel %vm21, %v19, -inf
    %23 = vmax.xlane.f32.xlu0 %v22
    %v24 = vpop.xlane.xlu0 %23
    %v25 = vsub.f32 %v19, %v24
    %v26 = vmul.f32 %v25, 1.442695
    %v27 = vpow.pop %v26
    %v28 = vsel %vm21, %v27, 0.0
    %29 = vadd.xlane.f32.xlu0 %v28
    %v30 = vpop.xlane.xlu0 %29
    %v31 = vrcp.pop %v30
    %v32 = vmul.f32 1.0, %v31
    %v33 = vmul.f32 %v27, %v32
    %v34 = vmul.f32 %v20, %v33
    %v35 = vld [vmem:[#allocation2] sm:$0x1]
    %vm36 = vcmask 64512
    %v38 = vsel %vm36, 1.0, 0
    %40 = vmatprep.subr.mxu0 0.0
    %41 = vmatpush1.msra.mxu0 %v34
    %42 = vmatprep.subr.mxu0 0.0
    %43 = vmatpush1.msra.mxu0 0.0
    %44 = vmatprep.subr.mxu0 0.0
    %45 = vmatpush1.msra.mxu0 0.0
    %46 = vmatprep.subr.mxu0 0.0
    %47 = vmatpush1.msra.mxu0 0.0
    %48 = vmatprep.subr.mxu0 0.0
    %49 = vmatpush1.msra.mxu0 0.0
    %50 = vmatprep.subr.mxu0 0.0
    %51 = vmatpush1.msra.mxu0 0.0
    %52 = vmatprep.subr.mxu0 0.0
    %53 = vmatpush1.msra.mxu0 0.0
    %54 = vmatprep.subr.mxu0 0.0
    %55 = vmatpush1.msra.mxu0 0.0
    %56 = vmatprep.subr.mxu0 0.0
    %57 = vmatpush1.msra.mxu0 0.0
    %58 = vmatprep.subr.mxu0 0.0
    %59 = vmatpush1.msra.mxu0 0.0
    %60 = vmatprep.subr.mxu0 0.0
    %61 = vmatpush1.msra.mxu0 0.0
    %62 = vmatprep.subr.mxu0 0.0
    %63 = vmatpush1.msra.mxu0 0.0
    %64 = vmatprep.subr.mxu0 0.0
    %65 = vmatpush1.msra.mxu0 0.0
    %66 = vmatprep.subr.mxu0 0.0
    %67 = vmatpush1.msra.mxu0 0.0
    %68 = vmatprep.subr.mxu0 0.0
    %69 = vmatpush1.msra.mxu0 0.0
    %70 = vmatprep.subr.mxu0 0.0
    %71 = vmatpush1.msra.mxu0 0.0
    %72 = vmatprep.subr.mxu0 0.0
    %73 = vmatpush1.msra.mxu0 0.0
    %74 = vmatprep.subr.mxu0 0.0
    %75 = vmatpush1.msra.mxu0 0.0
    %76 = vmatprep.subr.mxu0 0.0
    %77 = vmatpush1.msra.mxu0 0.0
    %78 = vmatprep.subr.mxu0 0.0
    %79 = vmatpush1.msra.mxu0 0.0
    %80 = vmatprep.subr.mxu0 0.0
    %81 = vmatpush1.msra.mxu0 0.0
    %82 = vmatprep.subr.mxu0 0.0
    %83 = vmatpush1.msra.mxu0 0.0
    %84 = vmatprep.subr.mxu0 0.0
    %85 = vmatpush1.msra.mxu0 0.0
    %86 = vmatprep.subr.mxu0 0.0
    %87 = vmatpush1.msra.mxu0 0.0
    %88 = vmatprep.subr.mxu0 0.0
    %89 = vmatpush1.msra.mxu0 0.0
    %90 = vmatprep.subr.mxu0 0.0
    %91 = vmatpush1.msra.mxu0 0.0
    %92 = vmatprep.subr.mxu0 0.0
    %93 = vmatpush1.msra.mxu0 0.0
    %94 = vmatprep.subr.mxu0 0.0
    %95 = vmatpush1.msra.mxu0 0.0
    %96 = vmatprep.subr.mxu0 0.0
    %97 = vmatpush1.msra.mxu0 0.0
    %98 = vmatprep.subr.mxu0 0.0
    %99 = vmatpush1.msra.mxu0 0.0
    %100 = vmatprep.subr.mxu0 0.0
    %101 = vmatpush1.msra.mxu0 0.0
    %102 = vmatprep.subr.mxu0 0.0
    %103 = vmatpush1.msra.mxu0 0.0
    %104 = vmatprep.mubr.f32.mxu0 0.0
    %105 = vmatmul.mubr.f32.gmra.mrb[0].mxu0 %v38
    %v106 = vpop.f32.mrb[0].mxu0
    %v107 = vadd.f32 0.0, %v106
    %v108 = vpop.f32.mrb[0].mxu0
    %109 = vdwg.mxu0
    %v110 = vadd.f32 %v35, %v107
    %vm111 = vcmask 24576
    %112 = vst.msk [vmem:[#allocation2] sm:$0x1] %vm111, %v110
    %v113 = vld [vmem:[#allocation3] sm:$0x1]
    %114 = vmatprep.subr.mxu0 0.0
    %115 = vmatpush1.msra.mxu0 %v20
    %116 = vmatprep.subr.mxu0 0.0
    %117 = vmatpush1.msra.mxu0 0.0
    %118 = vmatprep.subr.mxu0 0.0
    %119 = vmatpush1.msra.mxu0 0.0
    %120 = vmatprep.subr.mxu0 0.0
    %121 = vmatpush1.msra.mxu0 0.0
    %122 = vmatprep.subr.mxu0 0.0
    %123 = vmatpush1.msra.mxu0 0.0
    %124 = vmatprep.subr.mxu0 0.0
    %125 = vmatpush1.msra.mxu0 0.0
    %126 = vmatprep.subr.mxu0 0.0
    %127 = vmatpush1.msra.mxu0 0.0
    %128 = vmatprep.subr.mxu0 0.0
    %129 = vmatpush1.msra.mxu0 0.0
    %130 = vmatprep.subr.mxu0 0.0
    %131 = vmatpush1.msra.mxu0 0.0
    %132 = vmatprep.subr.mxu0 0.0
    %133 = vmatpush1.msra.mxu0 0.0
    %134 = vmatprep.subr.mxu0 0.0
    %135 = vmatpush1.msra.mxu0 0.0
    %136 = vmatprep.subr.mxu0 0.0
    %137 = vmatpush1.msra.mxu0 0.0
    %138 = vmatprep.subr.mxu0 0.0
    %139 = vmatpush1.msra.mxu0 0.0
    %140 = vmatprep.subr.mxu0 0.0
    %141 = vmatpush1.msra.mxu0 0.0
    %142 = vmatprep.subr.mxu0 0.0
    %143 = vmatpush1.msra.mxu0 0.0
    %144 = vmatprep.subr.mxu0 0.0
    %145 = vmatpush1.msra.mxu0 0.0
    %146 = vmatprep.subr.mxu0 0.0
    %147 = vmatpush1.msra.mxu0 0.0
    %148 = vmatprep.subr.mxu0 0.0
    %149 = vmatpush1.msra.mxu0 0.0
    %150 = vmatprep.subr.mxu0 0.0
    %151 = vmatpush1.msra.mxu0 0.0
    %152 = vmatprep.subr.mxu0 0.0
    %153 = vmatpush1.msra.mxu0 0.0
    %154 = vmatprep.subr.mxu0 0.0
    %155 = vmatpush1.msra.mxu0 0.0
    %156 = vmatprep.subr.mxu0 0.0
    %157 = vmatpush1.msra.mxu0 0.0
    %158 = vmatprep.subr.mxu0 0.0
    %159 = vmatpush1.msra.mxu0 0.0
    %160 = vmatprep.subr.mxu0 0.0
    %161 = vmatpush1.msra.mxu0 0.0
    %162 = vmatprep.subr.mxu0 0.0
    %163 = vmatpush1.msra.mxu0 0.0
    %164 = vmatprep.subr.mxu0 0.0
    %165 = vmatpush1.msra.mxu0 0.0
    %166 = vmatprep.subr.mxu0 0.0
    %167 = vmatpush1.msra.mxu0 0.0
    %168 = vmatprep.subr.mxu0 0.0
    %169 = vmatpush1.msra.mxu0 0.0
    %170 = vmatprep.subr.mxu0 0.0
    %171 = vmatpush1.msra.mxu0 0.0
    %172 = vmatprep.subr.mxu0 0.0
    %173 = vmatpush1.msra.mxu0 0.0
    %174 = vmatprep.subr.mxu0 0.0
    %175 = vmatpush1.msra.mxu0 0.0
    %176 = vmatprep.subr.mxu0 0.0
    %177 = vmatpush1.msra.mxu0 0.0
    %178 = vmatprep.mubr.f32.mxu0 0.0
    %179 = vmatmul.mubr.f32.gmra.mrb[0].mxu0 %v38
    %v180 = vpop.f32.mrb[0].mxu0
    %v181 = vadd.f32 0.0, %v180
    %v182 = vpop.f32.mrb[0].mxu0
    %183 = vdwg.mxu0
    %v184 = vadd.f32 %v113, %v181
    %185 = vst.msk [vmem:[#allocation3] sm:$0x1] %vm111, %v184
    // Predicated region
    $region14: #{tpu_custom_call.1} parent=1 // pred_check
      %p186 = pneg %p12
    $region15: #{tpu_custom_call.1} parent=1 // pred_check_branch
      %188 = sbr.rel (%p186) target = $region17
    $region16: #{tpu_custom_call.1} parent=1 // pred_region
      %v189 = vld [vmem:[#allocation2] sm:$0x1]
      %v190 = vld [vmem:[#allocation3] sm:$0x1]
      %v191 = vadd.f32 %v190, 1e-12
      %v192 = vrcp.pop %v191
      %v193 = vmul.f32 %v189, %v192
      %v194 = vsel %vm111, %v193, 0.0
      %195 = vadd.xlane.f32.xlu0 %v194
      %v196 = vpop.xlane.xlu0 %195
      %v197 = vrot.slane %v196, 4
      %v198 = vadd.f32 %v196, %v197
      %v199 = vrot.slane %v198, 2
      %v200 = vadd.f32 %v198, %v199
      %v201 = vrot.slane %v200, 1
      %v202 = vadd.f32 %v200, %v201
      %s203 = vtos %v202
      %v204 = vrcp.pop 4.0
      %s205 = vtos %v204
      %s206 = smul.f32 %s203, %s205
      %s207 = ssub.f32 1.0, %s206
      %s208 = scalar_lea.smem [#allocation4], 0
      %209 = sst [smem:[%s208]] %s207
    $region17: #{tpu_custom_call.1} parent=1 // pred_fallthru
      _
    // Predicated region
    $region18: #{tpu_custom_call.1} parent=1 // pred_check
      _
    $region19: #{tpu_custom_call.1} parent=1 // pred_check_branch
      %211 = sbr.rel (0) target = $region21
    $region20: #{tpu_custom_call.1} parent=1 // pred_region
      %s213 = ssub.s32 16, 16
      %214 = vsyncadd [#allocation5], %s213
      %217 = dma.smem_to_hbm [#allocation4], 16, %s2, [#allocation5]
    $region21: #{tpu_custom_call.1} parent=1 // pred_fallthru
      _
    // Predicated region
    $region22: #{tpu_custom_call.1} parent=1 // pred_check
      _
    $region23: #{tpu_custom_call.1} parent=1 // pred_check_branch
      %219 = sbr.rel (0) target = $region25
    $region24: #{tpu_custom_call.1} parent=1 // pred_region
      %220 = dma.done [#allocation5], 16
    $region25: #{tpu_custom_call.1} parent=1 // pred_fallthru
      _
    %221 = sfence
    %222 = vsyncpa [#allocation5], 1

</llo_original>
